<compile_context>
chip_gen: v7x
topology: tpu7x:2x2x1
jax: 0.10.0
libtpu: 0.0.40
codegen_flags: <defaults>
</compile_context>

<pallas_src>
import jax
import jax.numpy as jnp
from jax.experimental import pallas as pl
from jax.experimental.pallas import tpu as pltpu


_EPS = 1e-5
_LEAKY_SLOPE = 0.01
_LAMBDA_1 = 0.7
_LAMBDA_2 = 0.3


def _meta_fusion_kernel(meta_ref, imgs_ref, w_ref, b_ref, g_ref, beta_ref,
                        out_ref):
    """One grid step = one TILE_V-wide slab of features (full batch)."""
    meta = meta_ref[...].astype(jnp.float32)             # (B, U)
    imgs = imgs_ref[...].astype(jnp.float32)             # (B, TV)

    # Fused Linear for both branches: single MXU call on packed weights
    # laid out as [fb_tile | gb_tile] along the lane axis.
    y = jnp.dot(meta, w_ref[...].astype(jnp.float32),
                preferred_element_type=jnp.float32)      # (B, 2*TV)
    y = y + b_ref[...]

    # BatchNorm1d (training mode): batch stats per feature, biased variance,
    # computed in one pass (reuse the centered tensor).
    mean = jnp.mean(y, axis=0, keepdims=True)            # (1, 2*TV)
    centered = y - mean
    var = jnp.mean(centered * centered, axis=0, keepdims=True)
    t_both = centered * jax.lax.rsqrt(var + _EPS) * g_ref[...] + beta_ref[...]

    tv = t_both.shape[1] // 2                            # static, 128-aligned
    t1 = t_both[:, :tv]                                  # fb branch
    t2 = t_both[:, tv:]                                  # gb branch

    pre = imgs * t1
    act = jnp.maximum(pre, _LEAKY_SLOPE * pre)           # LeakyReLU(0.01)
    z = _LAMBDA_1 * act + _LAMBDA_2 * t2
    out_ref[...] = (z * jax.nn.sigmoid(z)).astype(out_ref.dtype)   # SiLU


def _choose_tile_v(V, max_tile_v):
    """Largest multiple of 128 that divides V and is <= max_tile_v."""
    if V % 128 != 0 or V <= max_tile_v:
        return V                 # single full-extent block (small / ragged V)
    best = 128
    t = 128
    while t <= max_tile_v:
        if V % t == 0:
            best = t
        t += 128
    return best


def meta_fusion_forward(imgs_nchw, metadata, params, *, max_tile_v=4096):
    """imgs_nchw: (B, C, H, W); metadata: (B, U).

    params (PyTorch layout):
      fb_w (V, U), fb_b (V,), fb_gamma (V,), fb_beta (V,)
      gb_w (V, U), gb_b (V,), gb_gamma (V,), gb_beta (V,)
    """
    B = imgs_nchw.shape[0]
    imgs_flat = imgs_nchw.reshape(B, -1)                 # glue: flatten NCHW
    V = imgs_flat.shape[1]
    U = metadata.shape[1]

    tile_v = _choose_tile_v(V, max_tile_v)
    n_tiles = V // tile_v

    # Pack the two branches per V-tile as [fb | gb] so each grid step does a
    # single matmul / single BatchNorm on a (.., 2*tile_v) lane-dense block.
    def pack_w(wf, wg):                                  # (V, U) each
        a = wf.T.reshape(U, n_tiles, tile_v)
        b = wg.T.reshape(U, n_tiles, tile_v)
        return jnp.concatenate([a, b], axis=-1).reshape(U, n_tiles * 2 * tile_v)

    def pack_vec(vf, vg):                                # (V,) each
        a = vf.reshape(1, n_tiles, tile_v)
        b = vg.reshape(1, n_tiles, tile_v)
        return jnp.concatenate([a, b], axis=-1).reshape(1, n_tiles * 2 * tile_v)

    w_pack = pack_w(params["fb_w"], params["gb_w"]).astype(jnp.float32)
    b_pack = pack_vec(params["fb_b"], params["gb_b"]).astype(jnp.float32)
    g_pack = pack_vec(params["fb_gamma"], params["gb_gamma"]).astype(jnp.float32)
    beta_pack = pack_vec(params["fb_beta"], params["gb_beta"]).astype(jnp.float32)

    return pl.pallas_call(
        _meta_fusion_kernel,
        out_shape=jax.ShapeDtypeStruct((B, V), imgs_flat.dtype),
        grid=(n_tiles,),
        in_specs=[
            pl.BlockSpec((B, U), lambda j: (0, 0)),            # metadata (resident)
            pl.BlockSpec((B, tile_v), lambda j: (0, j)),       # imgs tile
            pl.BlockSpec((U, 2 * tile_v), lambda j: (0, j)),   # packed weights
            pl.BlockSpec((1, 2 * tile_v), lambda j: (0, j)),   # packed bias
            pl.BlockSpec((1, 2 * tile_v), lambda j: (0, j)),   # packed gamma
            pl.BlockSpec((1, 2 * tile_v), lambda j: (0, j)),   # packed beta
        ],
        out_specs=pl.BlockSpec((B, tile_v), lambda j: (0, j)),
        compiler_params=pltpu.CompilerParams(
            dimension_semantics=("parallel",),      # shard V-tiles across TCs (v7x)
            vmem_limit_bytes=32 * 1024 * 1024,      # admit large tiles on v5e too
        ),
    )(metadata, imgs_flat, w_pack, b_pack, g_pack, beta_pack)


def _reference(imgs_nchw, metadata, params):
    """Pure-JAX reference for a correctness sanity check."""
    B = imgs_nchw.shape[0]
    imgs = imgs_nchw.reshape(B, -1).astype(jnp.float32)
    meta = metadata.astype(jnp.float32)

    def linear_bn(w, b, g, beta):
        y = jnp.dot(meta, w.T, precision=jax.lax.Precision.HIGHEST) + b
        mean = jnp.mean(y, axis=0, keepdims=True)
        var = jnp.mean((y - mean) ** 2, axis=0, keepdims=True)
        return (y - mean) / jnp.sqrt(var + _EPS) * g + beta

    t1 = linear_bn(params["fb_w"], params["fb_b"],
                   params["fb_gamma"], params["fb_beta"])
    t2 = linear_bn(params["gb_w"], params["gb_b"],
                   params["gb_gamma"], params["gb_beta"])
    pre = imgs * t1
    act = jnp.where(pre >= 0, pre, _LEAKY_SLOPE * pre)
    z = _LAMBDA_1 * act + _LAMBDA_2 * t2
    return z * jax.nn.sigmoid(z)


if __name__ == "__main__":
    # Small shapes: B=8, metadata dim U=32, imgs NCHW (8, 4, 16, 16) -> V = 1024.
    B, U = 8, 32
    C, H, W = 4, 16, 16
    V = C * H * W  # 1024

    key = jax.random.PRNGKey(0)
    (k_img, k_meta, k_wf, k_bf, k_gf, k_betaf,
     k_wg, k_bg, k_gg, k_betag) = jax.random.split(key, 10)

    imgs = jax.random.normal(k_img, (B, C, H, W), dtype=jnp.float32)
    metadata = jax.random.normal(k_meta, (B, U), dtype=jnp.float32)

    # PyTorch-layout parameters: Linear weight (V, U), bias (V,), BN affine (V,).
    params = {
        "fb_w": 0.1 * jax.random.normal(k_wf, (V, U), dtype=jnp.float32),
        "fb_b": 0.1 * jax.random.normal(k_bf, (V,), dtype=jnp.float32),
        "fb_gamma": 1.0 + 0.1 * jax.random.normal(k_gf, (V,), dtype=jnp.float32),
        "fb_beta": 0.1 * jax.random.normal(k_betaf, (V,), dtype=jnp.float32),
        "gb_w": 0.1 * jax.random.normal(k_wg, (V, U), dtype=jnp.float32),
        "gb_b": 0.1 * jax.random.normal(k_bg, (V,), dtype=jnp.float32),
        "gb_gamma": 1.0 + 0.1 * jax.random.normal(k_gg, (V,), dtype=jnp.float32),
        "gb_beta": 0.1 * jax.random.normal(k_betag, (V,), dtype=jnp.float32),
    }

    # max_tile_v=256 so this small demo exercises a multi-step (4-tile) grid;
    # production default (4096) gives the large lane-dense tiles.
    out = meta_fusion_forward(imgs, metadata, params, max_tile_v=256)
    out = jax.block_until_ready(out)

    ref = _reference(imgs, metadata, params)
    assert out.shape == (B, V), out.shape
    max_err = float(jnp.max(jnp.abs(out - ref)))
    assert jnp.allclose(out, ref, atol=2e-3, rtol=2e-3), max_err

    # TODO(synk): PyTorch training-mode BatchNorm1d also updates
    # running_mean/running_var as a side effect; only the forward output is
    # reproduced here.
    print("KERNEL_OK")
</pallas_src>

<mosaic_0001>
module attributes {stable_mosaic.version = 11 : i64} {
  func.func @_meta_fusion_kernel(%arg0: i32, %arg1: memref<8x32xf32, #tpu.memory_space<vmem>>, %arg2: memref<8x256xf32, #tpu.memory_space<vmem>>, %arg3: memref<32x512xf32, #tpu.memory_space<vmem>>, %arg4: memref<1x512xf32, #tpu.memory_space<vmem>>, %arg5: memref<1x512xf32, #tpu.memory_space<vmem>>, %arg6: memref<1x512xf32, #tpu.memory_space<vmem>>, %arg7: memref<8x256xf32, #tpu.memory_space<vmem>>) attributes {dimension_semantics = [#tpu.dimension_semantics<parallel>], iteration_bounds = array<i64: 4>, scalar_prefetch = 0 : i64, scratch_operands = 0 : i64, tpu.core_type = #tpu.core_type<tc>, window_params = [{pipeline_mode = #tpu.pipeline_mode<synchronous>, transform_indices = @transform_0, window_bounds = array<i64: 8, 32>}, {transform_indices = @transform_1, window_bounds = array<i64: 8, 256>}, {transform_indices = @transform_2, window_bounds = array<i64: 32, 512>}, {transform_indices = @transform_3, window_bounds = array<i64: 1, 512>}, {transform_indices = @transform_4, window_bounds = array<i64: 1, 512>}, {transform_indices = @transform_5, window_bounds = array<i64: 1, 512>}, {transform_indices = @transform_6, window_bounds = array<i64: 8, 256>}]} {
    %c0 = arith.constant 0 : index
    %c0_0 = arith.constant 0 : index
    %0 = vector.load %arg1[%c0, %c0_0] : memref<8x32xf32, #tpu.memory_space<vmem>>, vector<8x32xf32>
    %c0_1 = arith.constant 0 : index
    %c0_2 = arith.constant 0 : index
    %1 = vector.load %arg2[%c0_1, %c0_2] : memref<8x256xf32, #tpu.memory_space<vmem>>, vector<8x256xf32>
    %c0_3 = arith.constant 0 : index
    %c0_4 = arith.constant 0 : index
    %2 = vector.load %arg3[%c0_3, %c0_4] : memref<32x512xf32, #tpu.memory_space<vmem>>, vector<32x512xf32>
    %cst = arith.constant dense<0.000000e+00> : vector<8x512xf32>
    %3 = tpu.matmul %0, %2, %cst {dimension_numbers = #tpu.dot_dimension_numbers<[1], [0], [0], [1], [0, 0, 1, 1], [], []>} : vector<8x32xf32>, vector<32x512xf32>, vector<8x512xf32> -> vector<8x512xf32>
    %c0_5 = arith.constant 0 : index
    %c0_6 = arith.constant 0 : index
    %4 = vector.load %arg4[%c0_5, %c0_6] : memref<1x512xf32, #tpu.memory_space<vmem>>, vector<1x512xf32>
    %5 = vector.broadcast %4 : vector<1x512xf32> to vector<8x512xf32>
    %6 = arith.addf %3, %5 : vector<8x512xf32>
    %cst_7 = arith.constant dense<0.000000e+00> : vector<512xf32>
    %7 = vector.multi_reduction <add>, %6, %cst_7 [0] : vector<8x512xf32> to vector<512xf32>
    %8 = vector.shape_cast %7 : vector<512xf32> to vector<1x512xf32>
    %cst_8 = arith.constant 8.000000e+00 : f32
    %9 = vector.broadcast %cst_8 : f32 to vector<1x512xf32>
    %10 = arith.divf %8, %9 : vector<1x512xf32>
    %11 = vector.broadcast %10 : vector<1x512xf32> to vector<8x512xf32>
    %12 = arith.subf %6, %11 : vector<8x512xf32>
    %13 = arith.mulf %12, %12 : vector<8x512xf32>
    %cst_9 = arith.constant dense<0.000000e+00> : vector<512xf32>
    %14 = vector.multi_reduction <add>, %13, %cst_9 [0] : vector<8x512xf32> to vector<512xf32>
    %15 = vector.shape_cast %14 : vector<512xf32> to vector<1x512xf32>
    %cst_10 = arith.constant 8.000000e+00 : f32
    %16 = vector.broadcast %cst_10 : f32 to vector<1x512xf32>
    %17 = arith.divf %15, %16 : vector<1x512xf32>
    %cst_11 = arith.constant 9.99999974E-6 : f32
    %18 = vector.broadcast %cst_11 : f32 to vector<1x512xf32>
    %19 = arith.addf %17, %18 : vector<1x512xf32>
    %20 = math.rsqrt %19 : vector<1x512xf32>
    %21 = vector.broadcast %20 : vector<1x512xf32> to vector<8x512xf32>
    %22 = arith.mulf %12, %21 : vector<8x512xf32>
    %c0_12 = arith.constant 0 : index
    %c0_13 = arith.constant 0 : index
    %23 = vector.load %arg5[%c0_12, %c0_13] : memref<1x512xf32, #tpu.memory_space<vmem>>, vector<1x512xf32>
    %24 = vector.broadcast %23 : vector<1x512xf32> to vector<8x512xf32>
    %25 = arith.mulf %22, %24 : vector<8x512xf32>
    %c0_14 = arith.constant 0 : index
    %c0_15 = arith.constant 0 : index
    %26 = vector.load %arg6[%c0_14, %c0_15] : memref<1x512xf32, #tpu.memory_space<vmem>>, vector<1x512xf32>
    %27 = vector.broadcast %26 : vector<1x512xf32> to vector<8x512xf32>
    %28 = arith.addf %25, %27 : vector<8x512xf32>
    %29 = vector.extract_strided_slice %28 {offsets = [0, 0], sizes = [8, 256], strides = [1, 1]} : vector<8x512xf32> to vector<8x256xf32>
    %30 = vector.extract_strided_slice %28 {offsets = [0, 256], sizes = [8, 256], strides = [1, 1]} : vector<8x512xf32> to vector<8x256xf32>
    %31 = arith.mulf %1, %29 : vector<8x256xf32>
    %cst_16 = arith.constant 0.00999999977 : f32
    %32 = vector.broadcast %cst_16 : f32 to vector<8x256xf32>
    %33 = arith.mulf %32, %31 : vector<8x256xf32>
    %34 = arith.maximumf %31, %33 : vector<8x256xf32>
    %cst_17 = arith.constant 0.699999988 : f32
    %35 = vector.broadcast %cst_17 : f32 to vector<8x256xf32>
    %36 = arith.mulf %35, %34 : vector<8x256xf32>
    %cst_18 = arith.constant 3.000000e-01 : f32
    %37 = vector.broadcast %cst_18 : f32 to vector<8x256xf32>
    %38 = arith.mulf %37, %30 : vector<8x256xf32>
    %39 = arith.addf %36, %38 : vector<8x256xf32>
    %40 = arith.negf %39 : vector<8x256xf32>
    %41 = math.exp %40 : vector<8x256xf32>
    %cst_19 = arith.constant 1.000000e+00 : f32
    %42 = vector.broadcast %cst_19 : f32 to vector<8x256xf32>
    %43 = arith.addf %42, %41 : vector<8x256xf32>
    %44 = arith.divf %42, %43 : vector<8x256xf32>
    %45 = arith.mulf %39, %44 : vector<8x256xf32>
    %c0_20 = arith.constant 0 : index
    %c0_21 = arith.constant 0 : index
    %46 = vector.load %arg7[%c0_20, %c0_21] : memref<8x256xf32, #tpu.memory_space<vmem>>, vector<8x256xf32>
    tpu.vector_store %arg7[%c0_20, %c0_21], %45 {strides = array<i32>} : memref<8x256xf32, #tpu.memory_space<vmem>>, vector<8x256xf32>,
    return
  }
  func.func @transform_0(%arg0: i32) -> (i32, i32) {
    %c0_i32 = arith.constant 0 : i32
    %c0_i32_0 = arith.constant 0 : i32
    %c0_i32_1 = arith.constant 0 : i32
    return %c0_i32, %c0_i32_0 : i32, i32
  }
  func.func @transform_1(%arg0: i32) -> (i32, i32) {
    %c0_i32 = arith.constant 0 : i32
    %c0_i32_0 = arith.constant 0 : i32
    return %c0_i32, %arg0 : i32, i32
  }
  func.func @transform_2(%arg0: i32) -> (i32, i32) {
    %c0_i32 = arith.constant 0 : i32
    %c0_i32_0 = arith.constant 0 : i32
    return %c0_i32, %arg0 : i32, i32
  }
  func.func @transform_3(%arg0: i32) -> (i32, i32) {
    %c0_i32 = arith.constant 0 : i32
    %c0_i32_0 = arith.constant 0 : i32
    return %c0_i32, %arg0 : i32, i32
  }
  func.func @transform_4(%arg0: i32) -> (i32, i32) {
    %c0_i32 = arith.constant 0 : i32
    %c0_i32_0 = arith.constant 0 : i32
    return %c0_i32, %arg0 : i32, i32
  }
  func.func @transform_5(%arg0: i32) -> (i32, i32) {
    %c0_i32 = arith.constant 0 : i32
    %c0_i32_0 = arith.constant 0 : i32
    return %c0_i32, %arg0 : i32, i32
  }
  func.func @transform_6(%arg0: i32) -> (i32, i32) {
    %c0_i32 = arith.constant 0 : i32
    %c0_i32_0 = arith.constant 0 : i32
    return %c0_i32, %arg0 : i32, i32
  }
}

</mosaic_0001>

<llo_original>
// kernel: tpu_custom_call.1
$region0: #{tpu_custom_call.1}
  #allocation0 [shape = 'u32[]', space=smem, size = 0x4, offset = 0x4, fixed_abs, tag = 'smem constant byte address 0x4 - core index']
  #allocation1 [shape = 'u32[144,128]{1,0:T(1,128)}', space=vmem, size = 0x12000, scoped, tag = 'internal scratch']
  %s0 = inlined_call_operand.hbm [shape: f32[8,32], index: 0, kind: input, shape index: {}]
  %s1 = inlined_call_operand.hbm [shape: f32[8,1024], index: 1, kind: input, shape index: {}]
  %s2 = inlined_call_operand.hbm [shape: f32[32,2048], index: 2, kind: input, shape index: {}]
  %s3 = inlined_call_operand.hbm [shape: f32[1,2048], index: 3, kind: input, shape index: {}]
  %s4 = inlined_call_operand.hbm [shape: f32[1,2048], index: 4, kind: input, shape index: {}]
  %s5 = inlined_call_operand.vmem [shape: f32[1,2048], index: 5, kind: input, shape index: {}]
  %s6 = inlined_call_operand.hbm [shape: f32[8,1024], index: 6, kind: output, shape index: {}]
  %s7 = sld [smem:[#allocation0]]
  $region77: #{tpu_custom_call.1} parent=0
    _
  %s9 = ssub.s32 1, %s7
  %s10 = scalar_select 0, %s9, %s7
  $region1: #{tpu_custom_call.1} parent=0
    #allocation2 [shape = 'u8[4096]{0}', space=vmem, size = 0x1000, scoped, tag = 'input window, operand 0, single buffered']
    #allocation3 [shape = 's32[2]{0}', space=sflag, size = 0x8, scoped, tag = 'scoped memory for tpu_custom_call.1']
    #allocation4 [shape = 's32[2]{0}', space=sflag, size = 0x8, scoped, tag = 'scoped memory for tpu_custom_call.1']
    #allocation5 [shape = 'u8[16384]{0}', space=vmem, size = 0x4000, scoped, tag = 'input window, operand 1']
    #allocation6 [shape = 's32[2]{0}', space=sflag, size = 0x8, scoped, tag = 'scoped memory for tpu_custom_call.1']
    #allocation7 [shape = 'u8[131072]{0}', space=vmem, size = 0x20000, scoped, tag = 'input window, operand 2']
    #allocation8 [shape = 'u8[4096]{0}', space=vmem, size = 0x1000, scoped, tag = 'input window, operand 3']
    #allocation9 [shape = 's32[2]{0}', space=sflag, size = 0x8, scoped, tag = 'scoped memory for tpu_custom_call.1']
    #allocation10 [shape = 'u8[4096]{0}', space=vmem, size = 0x1000, scoped, tag = 'input window, operand 4']
    #allocation11 [shape = 'u8[16384]{0}', space=vmem, size = 0x4000, scoped, tag = 'output window, operand 0']
    %11 = vsyncpa [#allocation3], 0
    %12 = vsyncpa [#allocation6], 0
    %s13 = scalar_lea.sflag [#allocation6], 1
    %14 = vsyncpa %s13, 0
    %15 = vsyncpa [#allocation9], 0
    %s16 = scalar_lea.sflag [#allocation9], 1
    %17 = vsyncpa %s16, 0
    %18 = vsyncpa [#allocation4], 0
    %s19 = scalar_lea.sflag [#allocation4], 1
    %20 = vsyncpa %s19, 0
    loop: start=0, step=1, limit=6
    $region2: #{tpu_custom_call.1} parent=1 // loop_pre_header
      _
    $region3: #{tpu_custom_call.1} parent=1 // loop_header
      %s22 = sphi 0, %s26
      %p23 = scmp.ge.s32.totalorder %s22, 6
      %s30 = sphi 0, %s30
      %s32 = sphi 0, %s30
      %s33 = sphi 0, %s32
      %s47 = sphi 0, %s33
      %s53 = sphi 0, %s55
      %s56 = sphi 0, %s53
      %s57 = sphi 0, %s56
      %s73 = sphi 0, %s57
      %s79 = sphi 0, %s81
      %s82 = sphi 0, %s79
      %s83 = sphi 0, %s82
      %s99 = sphi 0, %s83
      %s105 = sphi 0, %s107
      %s108 = sphi 0, %s105
      %s109 = sphi 0, %s108
      %s125 = sphi 0, %s109
      %s131 = sphi 0, %s133
      %s134 = sphi 0, %s131
      %s135 = sphi 0, %s134
      %s151 = sphi 0, %s135
      %s157 = sphi 0, %s159
      %s160 = sphi 0, %s157
      %s161 = sphi 0, %s160
      %s177 = sphi 0, %s161
      %s183 = sphi 0, %s185
      %s186 = sphi 0, %s183
      %s187 = sphi 0, %s186
      %s203 = sphi 0, %s187
    $region4: #{tpu_custom_call.1} parent=1 // loop_header_branch
      %25 = sbr.rel (%p23) target = $region8
    $region5: #{tpu_custom_call.1} parent=1 // loop_body
      %s27 = ssub.s32 %s22, 1
      %s28 = ssub.s32 %s22, 2
      %s29 = sadd.s32 %s22, 1
      %s31 = sadd.s32 %s30, 1
      %p34 = scmp.eq.s32.totalorder %s22, 3
      %p35 = scmp.ne.s32.totalorder %s30, %s32
      %p36 = scmp.eq.s32.totalorder %s22, 0
      %p37 = por %p35, %p36
      %p38 = scmp.ne.s32.totalorder %s30, %s32
      %p39 = scmp.eq.s32.totalorder %s27, 3
      %p40 = por %p38, %p39
      %p41 = scmp.ne.s32.totalorder %s32, %s33
      %p42 = scmp.eq.s32.totalorder %s27, 0
      %p43 = por %p41, %p42
      %p44 = scmp.ne.s32.totalorder %s32, %s33
      %p45 = scmp.eq.s32.totalorder %s28, 3
      %p46 = por %p44, %p45
      %p48 = scmp.ne.s32.totalorder %s33, %s47
      %p49 = scmp.eq.s32.totalorder %s28, 0
      %p50 = por %p48, %p49
      %s51 = ssub.s32 %s22, %s29
      %p52 = scmp.eq.s32.totalorder %s51, 0
      %s54 = sadd.s32 %s53, 1
      %s55 = scalar_select %p52, %s53, %s54
      %p58 = pneg %p52
      %p59 = scmp.eq.s32.totalorder %s22, 3
      %p60 = por %p58, %p59
      %p61 = scmp.ne.s32.totalorder %s53, %s56
      %p62 = scmp.eq.s32.totalorder %s22, 0
      %p63 = por %p61, %p62
      %p64 = scmp.ne.s32.totalorder %s53, %s56
      %p65 = scmp.eq.s32.totalorder %s27, 3
      %p66 = por %p64, %p65
      %p67 = scmp.ne.s32.totalorder %s56, %s57
      %p68 = scmp.eq.s32.totalorder %s27, 0
      %p69 = por %p67, %p68
      %p70 = scmp.ne.s32.totalorder %s56, %s57
      %p71 = scmp.eq.s32.totalorder %s28, 3
      %p72 = por %p70, %p71
      %p74 = scmp.ne.s32.totalorder %s57, %s73
      %p75 = scmp.eq.s32.totalorder %s28, 0
      %p76 = por %p74, %p75
      %s77 = ssub.s32 %s22, %s29
      %p78 = scmp.eq.s32.totalorder %s77, 0
      %s80 = sadd.s32 %s79, 1
      %s81 = scalar_select %p78, %s79, %s80
      %p84 = pneg %p78
      %p85 = scmp.eq.s32.totalorder %s22, 3
      %p86 = por %p84, %p85
      %p87 = scmp.ne.s32.totalorder %s79, %s82
      %p88 = scmp.eq.s32.totalorder %s22, 0
      %p89 = por %p87, %p88
      %p90 = scmp.ne.s32.totalorder %s79, %s82
      %p91 = scmp.eq.s32.totalorder %s27, 3
      %p92 = por %p90, %p91
      %p93 = scmp.ne.s32.totalorder %s82, %s83
      %p94 = scmp.eq.s32.totalorder %s27, 0
      %p95 = por %p93, %p94
      %p96 = scmp.ne.s32.totalorder %s82, %s83
      %p97 = scmp.eq.s32.totalorder %s28, 3
      %p98 = por %p96, %p97
      %p100 = scmp.ne.s32.totalorder %s83, %s99
      %p101 = scmp.eq.s32.totalorder %s28, 0
      %p102 = por %p100, %p101
      %s103 = ssub.s32 %s22, %s29
      %p104 = scmp.eq.s32.totalorder %s103, 0
      %s106 = sadd.s32 %s105, 1
      %s107 = scalar_select %p104, %s105, %s106
      %p110 = pneg %p104
      %p111 = scmp.eq.s32.totalorder %s22, 3
      %p112 = por %p110, %p111
      %p113 = scmp.ne.s32.totalorder %s105, %s108
      %p114 = scmp.eq.s32.totalorder %s22, 0
      %p115 = por %p113, %p114
      %p116 = scmp.ne.s32.totalorder %s105, %s108
      %p117 = scmp.eq.s32.totalorder %s27, 3
      %p118 = por %p116, %p117
      %p119 = scmp.ne.s32.totalorder %s108, %s109
      %p120 = scmp.eq.s32.totalorder %s27, 0
      %p121 = por %p119, %p120
      %p122 = scmp.ne.s32.totalorder %s108, %s109
      %p123 = scmp.eq.s32.totalorder %s28, 3
      %p124 = por %p122, %p123
      %p126 = scmp.ne.s32.totalorder %s109, %s125
      %p127 = scmp.eq.s32.totalorder %s28, 0
      %p128 = por %p126, %p127
      %s129 = ssub.s32 %s22, %s29
      %p130 = scmp.eq.s32.totalorder %s129, 0
      %s132 = sadd.s32 %s131, 1
      %s133 = scalar_select %p130, %s131, %s132
      %p136 = pneg %p130
      %p137 = scmp.eq.s32.totalorder %s22, 3
      %p138 = por %p136, %p137
      %p139 = scmp.ne.s32.totalorder %s131, %s134
      %p140 = scmp.eq.s32.totalorder %s22, 0
      %p141 = por %p139, %p140
      %p142 = scmp.ne.s32.totalorder %s131, %s134
      %p143 = scmp.eq.s32.totalorder %s27, 3
      %p144 = por %p142, %p143
      %p145 = scmp.ne.s32.totalorder %s134, %s135
      %p146 = scmp.eq.s32.totalorder %s27, 0
      %p147 = por %p145, %p146
      %p148 = scmp.ne.s32.totalorder %s134, %s135
      %p149 = scmp.eq.s32.totalorder %s28, 3
      %p150 = por %p148, %p149
      %p152 = scmp.ne.s32.totalorder %s135, %s151
      %p153 = scmp.eq.s32.totalorder %s28, 0
      %p154 = por %p152, %p153
      %s155 = ssub.s32 %s22, %s29
      %p156 = scmp.eq.s32.totalorder %s155, 0
      %s158 = sadd.s32 %s157, 1
      %s159 = scalar_select %p156, %s157, %s158
      %p162 = pneg %p156
      %p163 = scmp.eq.s32.totalorder %s22, 3
      %p164 = por %p162, %p163
      %p165 = scmp.ne.s32.totalorder %s157, %s160
      %p166 = scmp.eq.s32.totalorder %s22, 0
      %p167 = por %p165, %p166
      %p168 = scmp.ne.s32.totalorder %s157, %s160
      %p169 = scmp.eq.s32.totalorder %s27, 3
      %p170 = por %p168, %p169
      %p171 = scmp.ne.s32.totalorder %s160, %s161
      %p172 = scmp.eq.s32.totalorder %s27, 0
      %p173 = por %p171, %p172
      %p174 = scmp.ne.s32.totalorder %s160, %s161
      %p175 = scmp.eq.s32.totalorder %s28, 3
      %p176 = por %p174, %p175
      %p178 = scmp.ne.s32.totalorder %s161, %s177
      %p179 = scmp.eq.s32.totalorder %s28, 0
      %p180 = por %p178, %p179
      %s181 = ssub.s32 %s22, %s29
      %p182 = scmp.eq.s32.totalorder %s181, 0
      %s184 = sadd.s32 %s183, 1
      %s185 = scalar_select %p182, %s183, %s184
      %p188 = pneg %p182
      %p189 = scmp.eq.s32.totalorder %s22, 3
      %p190 = por %p188, %p189
      %p191 = scmp.ne.s32.totalorder %s183, %s186
      %p192 = scmp.eq.s32.totalorder %s22, 0
      %p193 = por %p191, %p192
      %p194 = scmp.ne.s32.totalorder %s183, %s186
      %p195 = scmp.eq.s32.totalorder %s27, 3
      %p196 = por %p194, %p195
      %p197 = scmp.ne.s32.totalorder %s186, %s187
      %p198 = scmp.eq.s32.totalorder %s27, 0
      %p199 = por %p197, %p198
      %p200 = scmp.ne.s32.totalorder %s186, %s187
      %p201 = scmp.eq.s32.totalorder %s28, 3
      %p202 = por %p200, %p201
      %p204 = scmp.ne.s32.totalorder %s187, %s203
      %p205 = scmp.eq.s32.totalorder %s28, 0
      %p206 = por %p204, %p205
      %p207 = scmp.le.s32.totalorder 1, %s22
      %p208 = scmp.lt.s32.totalorder %s22, 5
      %p209 = pnand %p207, %p208
      %p210 = pneg %p209
      // Predicated region
      $region9: #{tpu_custom_call.1} parent=5 // pred_check
        _
      $region10: #{tpu_custom_call.1} parent=5 // pred_check_branch
        %212 = sbr.rel (%p209) target = $region12
      $region11: #{tpu_custom_call.1} parent=5 // pred_region
        %s213 = ssub.s32 %s22, 1
        // Predicated region
        $region13: #{tpu_custom_call.1} parent=11 // pred_check
          %p214 = pneg %p43
        $region14: #{tpu_custom_call.1} parent=11 // pred_check_branch
          %216 = sbr.rel (%p214) target = $region16
        $region15: #{tpu_custom_call.1} parent=11 // pred_region
          %s218 = ssub.s32 128, 128
          %219 = vsyncadd [#allocation3], %s218
          %s221 = sshll.u32 [#allocation2], 4
          %s222 = int_to_ptr.vmem [resolvable:$true] %s221
          %224 = dma.hbm_to_vmem [thread:$0]  %s0, 128, %s222, [#allocation3]
        $region16: #{tpu_custom_call.1} parent=11 // pred_fallthru
          _
      $region12: #{tpu_custom_call.1} parent=5 // pred_fallthru
        _
      %p225 = scmp.lt.s32.totalorder %s22, 4
      // Predicated region
      $region17: #{tpu_custom_call.1} parent=5 // pred_check
        %p226 = pneg %p225
      $region18: #{tpu_custom_call.1} parent=5 // pred_check_branch
        %228 = sbr.rel (%p226) target = $region20
      $region19: #{tpu_custom_call.1} parent=5 // pred_region
        // Predicated region
        $region21: #{tpu_custom_call.1} parent=19 // pred_check
          %p229 = pneg %p63
        $region22: #{tpu_custom_call.1} parent=19 // pred_check_branch
          %231 = sbr.rel (%p229) target = $region24
        $region23: #{tpu_custom_call.1} parent=19 // pred_region
          %s232 = sand.u32 %s22, 1
          %s233 = scalar_lea.sflag [#allocation6], %s232
          %s234 = sand.u32 %s53, 1
          %s235 = smul.addr %s234, 16
          %s236 = scalar_lea.vmem [#allocation5], %s235
          %s237 = smul.u32 2, %s22
          %s239 = ssub.s32 256, 256
          %240 = vsyncadd %s233, %s239
          %s241 = smul.addr %s237, 128
          %s242 = scalar_lea.hbm %s1, %s241
          %s244 = sshll.u32 %s236, 4
          %s245 = int_to_ptr.vmem [resolvable:$true] %s244
          %247 = dma.hbm_to_vmem [thread:$0]  %s242, 256, %s245, %s233
        $region24: #{tpu_custom_call.1} parent=19 // pred_fallthru
          _
        // Predicated region
        $region25: #{tpu_custom_call.1} parent=19 // pred_check
          %p248 = pneg %p89
        $region26: #{tpu_custom_call.1} parent=19 // pred_check_branch
          %250 = sbr.rel (%p248) target = $region28
        $region27: #{tpu_custom_call.1} parent=19 // pred_region
          %s251 = sand.u32 %s22, 1
          %s252 = scalar_lea.sflag [#allocation6], %s251
          %s253 = sand.u32 %s79, 1
          %s254 = smul.addr %s253, 128
          %s255 = scalar_lea.vmem [#allocation7], %s254
          %s256 = smul.u32 4, %s22
          %s258 = ssub.s32 2048, 2048
          %259 = vsyncadd %s252, %s258
          %s260 = smul.addr %s256, 128
          %s261 = scalar_lea.hbm %s2, %s260
          %s262 = sshll.u32 %s255, 4
          %s263 = int_to_ptr.vmem [resolvable:$true] %s262
          %268 = dma.hbm_to_vmem [thread:$0]  %s261, 2048, %s263, %s252, 2048, 512, 32
        $region28: #{tpu_custom_call.1} parent=19 // pred_fallthru
          _
        // Predicated region
        $region29: #{tpu_custom_call.1} parent=19 // pred_check
          %p269 = pneg %p115
        $region30: #{tpu_custom_call.1} parent=19 // pred_check_branch
          %271 = sbr.rel (%p269) target = $region32
        $region31: #{tpu_custom_call.1} parent=19 // pred_region
          %s272 = sand.u32 %s22, 1
          %s273 = scalar_lea.sflag [#allocation9], %s272
          %s274 = sand.u32 %s105, 1
          %s275 = smul.addr %s274, 4
          %s276 = scalar_lea.vmem [#allocation8], %s275
          %s277 = smul.u32 4, %s22
          %s279 = ssub.s32 64, 64
          %280 = vsyncadd %s273, %s279
          %s281 = smul.addr %s277, 16
          %s282 = scalar_lea.hbm %s3, %s281
          %s284 = sshll.u32 %s276, 4
          %s285 = int_to_ptr.vmem [resolvable:$true] %s284
          %287 = dma.hbm_to_vmem [thread:$0]  %s282, 64, %s285, %s273
        $region32: #{tpu_custom_call.1} parent=19 // pred_fallthru
          _
        // Predicated region
        $region33: #{tpu_custom_call.1} parent=19 // pred_check
          %p288 = pneg %p141
        $region34: #{tpu_custom_call.1} parent=19 // pred_check_branch
          %290 = sbr.rel (%p288) target = $region36
        $region35: #{tpu_custom_call.1} parent=19 // pred_region
          %s291 = sand.u32 %s22, 1
          %s292 = scalar_lea.sflag [#allocation9], %s291
          %s293 = sand.u32 %s131, 1
          %s294 = smul.addr %s293, 4
          %s295 = scalar_lea.vmem [#allocation10], %s294
          %s296 = smul.u32 4, %s22
          %s298 = ssub.s32 64, 64
          %299 = vsyncadd %s292, %s298
          %s300 = smul.addr %s296, 16
          %s301 = scalar_lea.hbm %s4, %s300
          %s303 = sshll.u32 %s295, 4
          %s304 = int_to_ptr.vmem [resolvable:$true] %s303
          %306 = dma.hbm_to_vmem [thread:$0]  %s301, 64, %s304, %s292
        $region36: #{tpu_custom_call.1} parent=19 // pred_fallthru
          _
        // Predicated region
        $region37: #{tpu_custom_call.1} parent=19 // pred_check
          %p307 = pneg %p167
        $region38: #{tpu_custom_call.1} parent=19 // pred_check_branch
          %309 = sbr.rel (%p307) target = $region40
        $region39: #{tpu_custom_call.1} parent=19 // pred_region
          %s310 = smul.u32 4, %s22
          %p311 = scmp.lt.s32.totalorder %s310, 15
          %s312 = scalar_select %p311, %s310, 15
          %s313 = scalar_lea.vmem %s5, %s312
          %s314 = smul.u32 4, %s22
        $region40: #{tpu_custom_call.1} parent=19 // pred_fallthru
          _
      $region20: #{tpu_custom_call.1} parent=5 // pred_fallthru
        _
      %p315 = scmp.le.s32.totalorder 1, %s22
      %p316 = scmp.lt.s32.totalorder %s22, 5
      %p317 = pnand %p315, %p316
      %p318 = pneg %p317
      // Predicated region
      $region41: #{tpu_custom_call.1} parent=5 // pred_check
        _
      $region42: #{tpu_custom_call.1} parent=5 // pred_check_branch
        %320 = sbr.rel (%p317) target = $region44
      $region43: #{tpu_custom_call.1} parent=5 // pred_region
        %s321 = ssub.s32 %s22, 1
        // Predicated region
        $region45: #{tpu_custom_call.1} parent=43 // pred_check
          %p322 = pneg %p43
        $region46: #{tpu_custom_call.1} parent=43 // pred_check_branch
          %324 = sbr.rel (%p322) target = $region48
        $region47: #{tpu_custom_call.1} parent=43 // pred_region
          %325 = dma.done [#allocation3], 128
        $region48: #{tpu_custom_call.1} parent=43 // pred_fallthru
          _
        %s326 = sand.u32 %s27, 1
        %s327 = scalar_lea.sflag [#allocation6], %s326
        %s328 = sand.u32 %s56, 1
        %s329 = smul.addr %s328, 16
        %s330 = scalar_lea.vmem [#allocation5], %s329
        // Predicated region
        $region49: #{tpu_custom_call.1} parent=43 // pred_check
          %p331 = pneg %p69
        $region50: #{tpu_custom_call.1} parent=43 // pred_check_branch
          %333 = sbr.rel (%p331) target = $region52
        $region51: #{tpu_custom_call.1} parent=43 // pred_region
          %334 = dma.done %s327, 256
        $region52: #{tpu_custom_call.1} parent=43 // pred_fallthru
          _
        %s335 = sand.u32 %s27, 1
        %s336 = scalar_lea.sflag [#allocation6], %s335
        %s337 = sand.u32 %s82, 1
        %s338 = smul.addr %s337, 128
        %s339 = scalar_lea.vmem [#allocation7], %s338
        // Predicated region
        $region53: #{tpu_custom_call.1} parent=43 // pred_check
          %p340 = pneg %p95
        $region54: #{tpu_custom_call.1} parent=43 // pred_check_branch
          %342 = sbr.rel (%p340) target = $region56
        $region55: #{tpu_custom_call.1} parent=43 // pred_region
          %343 = dma.done %s336, 2048
        $region56: #{tpu_custom_call.1} parent=43 // pred_fallthru
          _
        %s344 = sand.u32 %s27, 1
        %s345 = scalar_lea.sflag [#allocation9], %s344
        %s346 = sand.u32 %s108, 1
        %s347 = smul.addr %s346, 4
        %s348 = scalar_lea.vmem [#allocation8], %s347
        // Predicated region
        $region57: #{tpu_custom_call.1} parent=43 // pred_check
          %p349 = pneg %p121
        $region58: #{tpu_custom_call.1} parent=43 // pred_check_branch
          %351 = sbr.rel (%p349) target = $region60
        $region59: #{tpu_custom_call.1} parent=43 // pred_region
          %352 = dma.done %s345, 64
        $region60: #{tpu_custom_call.1} parent=43 // pred_fallthru
          _
        %s353 = sand.u32 %s27, 1
        %s354 = scalar_lea.sflag [#allocation9], %s353
        %s355 = sand.u32 %s134, 1
        %s356 = smul.addr %s355, 4
        %s357 = scalar_lea.vmem [#allocation10], %s356
        // Predicated region
        $region61: #{tpu_custom_call.1} parent=43 // pred_check
          %p358 = pneg %p147
        $region62: #{tpu_custom_call.1} parent=43 // pred_check_branch
          %360 = sbr.rel (%p358) target = $region64
        $region63: #{tpu_custom_call.1} parent=43 // pred_region
          %361 = dma.done %s354, 64
        $region64: #{tpu_custom_call.1} parent=43 // pred_fallthru
          _
        %p362 = pneg %p43
        %p363 = pneg %p40
        %s364 = sand.u32 %s27, 1
        %s365 = scalar_lea.sflag [#allocation6], %s364
        %s366 = sand.u32 %s56, 1
        %s367 = smul.addr %s366, 16
        %s368 = scalar_lea.vmem [#allocation5], %s367
        %p369 = pneg %p69
        %p370 = pneg %p66
        %s371 = sand.u32 %s27, 1
        %s372 = scalar_lea.sflag [#allocation6], %s371
        %s373 = sand.u32 %s82, 1
        %s374 = smul.addr %s373, 128
        %s375 = scalar_lea.vmem [#allocation7], %s374
        %p376 = pneg %p95
        %p377 = pneg %p92
        %s378 = sand.u32 %s27, 1
        %s379 = scalar_lea.sflag [#allocation9], %s378
        %s380 = sand.u32 %s108, 1
        %s381 = smul.addr %s380, 4
        %s382 = scalar_lea.vmem [#allocation8], %s381
        %p383 = pneg %p121
        %p384 = pneg %p118
        %s385 = sand.u32 %s27, 1
        %s386 = scalar_lea.sflag [#allocation9], %s385
        %s387 = sand.u32 %s134, 1
        %s388 = smul.addr %s387, 4
        %s389 = scalar_lea.vmem [#allocation10], %s388
        %p390 = pneg %p147
        %p391 = pneg %p144
        %s392 = smul.u32 4, %s27
        %p393 = scmp.lt.s32.totalorder %s392, 15
        %s394 = scalar_select %p393, %s392, 15
        %s395 = scalar_lea.vmem %s5, %s394
        %p396 = pneg %p173
        %p397 = pneg %p170
        %p398 = pneg %p199
        %p399 = pneg %p196
        %s400 = sand.u32 %s186, 1
        %s401 = scalar_lea.sflag [#allocation4], %s400
        %s402 = sand.u32 %s186, 1
        %s403 = smul.addr %s402, 16
        %s404 = scalar_lea.vmem [#allocation11], %s403
        %s405 = smul.u32 2, %s27
        %s406 = smul.u32 4, %s27
        %s407 = smul.u32 4, %s27
        %s408 = smul.u32 4, %s27
        %s409 = smul.u32 4, %s27
        %p410 = scmp.lt.s32.totalorder %s409, 15
        %s411 = scalar_select %p410, %s409, 15
        %s412 = scalar_lea.vmem %s5, %s411
        %s413 = smul.u32 4, %s27
        %s414 = smul.u32 2, %s27
        %v415 = vld [vmem:[#allocation2] sm:$0xff]
        %v416 = vld [vmem:[%s330] sm:$0xff]
        %v417 = vld [vmem:[%s330 + $0x8] sm:$0xff]
        %v418 = vld [vmem:[%s339] sm:$0xff]
        %v419 = vld [vmem:[%s339 + $0x8] sm:$0xff]
        %v420 = vld [vmem:[%s339 + $0x10] sm:$0xff]
        %v421 = vld [vmem:[%s339 + $0x18] sm:$0xff]
        %v422 = vld [vmem:[%s339 + $0x20] sm:$0xff]
        %v423 = vld [vmem:[%s339 + $0x28] sm:$0xff]
        %v424 = vld [vmem:[%s339 + $0x30] sm:$0xff]
        %v425 = vld [vmem:[%s339 + $0x38] sm:$0xff]
        %v426 = vld [vmem:[%s339 + $0x40] sm:$0xff]
        %v427 = vld [vmem:[%s339 + $0x48] sm:$0xff]
        %v428 = vld [vmem:[%s339 + $0x50] sm:$0xff]
        %v429 = vld [vmem:[%s339 + $0x58] sm:$0xff]
        %v430 = vld [vmem:[%s339 + $0x60] sm:$0xff]
        %v431 = vld [vmem:[%s339 + $0x68] sm:$0xff]
        %v432 = vld [vmem:[%s339 + $0x70] sm:$0xff]
        %v433 = vld [vmem:[%s339 + $0x78] sm:$0xff]
        %v434 = vld [vmem:[%s348] sm:$0xf]
        %v436 = vlaneseq
        %v437 = vshrl.u32 %v436, 7
        %v438 = vsub.s32 0, %v437
        %v439 = vrot.slane %v434, %v438
        %v440 = vlaneseq
        %v441 = vshrl.u32 %v440, 7
        %v442 = vsub.s32 1, %v441
        %v443 = vrot.slane %v434, %v442
        %v444 = vlaneseq
        %v445 = vshrl.u32 %v444, 7
        %v446 = vsub.s32 2, %v445
        %v447 = vrot.slane %v434, %v446
        %v448 = vlaneseq
        %v449 = vshrl.u32 %v448, 7
        %v450 = vsub.s32 3, %v449
        %v451 = vrot.slane %v434, %v450
        %vm456 = vcmask 261120
        %v458 = vsel %vm456, %v415, 0
        %460 = vmatprep.subr.mxu0 %v419
        %461 = vmatpush1.msra.mxu0 %v418
        %462 = vmatprep.subr.mxu0 %v423
        %463 = vmatpush1.msra.mxu0 %v422
        %464 = vmatprep.subr.mxu0 %v427
        %465 = vmatpush1.msra.mxu0 %v426
        %466 = vmatprep.subr.mxu0 %v431
        %467 = vmatpush1.msra.mxu0 %v430
        %468 = vmatprep.subr.mxu0 0.0
        %469 = vmatpush1.msra.mxu0 0.0
        %470 = vmatprep.subr.mxu0 0.0
        %471 = vmatpush1.msra.mxu0 0.0
        %472 = vmatprep.subr.mxu0 0.0
        %473 = vmatpush1.msra.mxu0 0.0
        %474 = vmatprep.subr.mxu0 0.0
        %475 = vmatpush1.msra.mxu0 0.0
        %476 = vmatprep.subr.mxu0 0.0
        %477 = vmatpush1.msra.mxu0 0.0
        %478 = vmatprep.subr.mxu0 0.0
        %479 = vmatpush1.msra.mxu0 0.0
        %480 = vmatprep.subr.mxu0 0.0
        %481 = vmatpush1.msra.mxu0 0.0
        %482 = vmatprep.subr.mxu0 0.0
        %483 = vmatpush1.msra.mxu0 0.0
        %484 = vmatprep.subr.mxu0 0.0
        %485 = vmatpush1.msra.mxu0 0.0
        %486 = vmatprep.subr.mxu0 0.0
        %487 = vmatpush1.msra.mxu0 0.0
        %488 = vmatprep.subr.mxu0 0.0
        %489 = vmatpush1.msra.mxu0 0.0
        %490 = vmatprep.subr.mxu0 0.0
        %491 = vmatpush1.msra.mxu0 0.0
        %492 = vmatprep.subr.mxu0 0.0
        %493 = vmatpush1.msra.mxu0 0.0
        %494 = vmatprep.subr.mxu0 0.0
        %495 = vmatpush1.msra.mxu0 0.0
        %496 = vmatprep.subr.mxu0 0.0
        %497 = vmatpush1.msra.mxu0 0.0
        %498 = vmatprep.subr.mxu0 0.0
        %499 = vmatpush1.msra.mxu0 0.0
        %500 = vmatprep.subr.mxu0 0.0
        %501 = vmatpush1.msra.mxu0 0.0
        %502 = vmatprep.subr.mxu0 0.0
        %503 = vmatpush1.msra.mxu0 0.0
        %504 = vmatprep.subr.mxu0 0.0
        %505 = vmatpush1.msra.mxu0 0.0
        %506 = vmatprep.subr.mxu0 0.0
        %507 = vmatpush1.msra.mxu0 0.0
        %508 = vmatprep.subr.mxu0 0.0
        %509 = vmatpush1.msra.mxu0 0.0
        %510 = vmatprep.subr.mxu0 0.0
        %511 = vmatpush1.msra.mxu0 0.0
        %512 = vmatprep.subr.mxu0 0.0
        %513 = vmatpush1.msra.mxu0 0.0
        %514 = vmatprep.subr.mxu0 0.0
        %515 = vmatpush1.msra.mxu0 0.0
        %516 = vmatprep.subr.mxu0 0.0
        %517 = vmatpush1.msra.mxu0 0.0
        %518 = vmatprep.subr.mxu0 0.0
        %519 = vmatpush1.msra.mxu0 0.0
        %520 = vmatprep.subr.mxu0 0.0
        %521 = vmatpush1.msra.mxu0 0.0
        %522 = vmatprep.subr.mxu0 0.0
        %523 = vmatpush1.msra.mxu0 0.0
        %524 = vmatprep.mubr.f32.mxu0 0.0
        %525 = vmatmul.mubr.f32.gmra.mrb[0].mxu0 %v458
        %v526 = vpop.f32.mrb[0].mxu0
        %v527 = vadd.f32 %v439, %v526
        %v528 = vpop.f32.mrb[0].mxu0
        %v529 = vadd.f32 %v443, %v528
        %530 = vdwg.mxu0
        %531 = vmatprep.subr.mxu0 %v421
        %532 = vmatpush1.msra.mxu0 %v420
        %533 = vmatprep.subr.mxu0 %v425
        %534 = vmatpush1.msra.mxu0 %v424
        %535 = vmatprep.subr.mxu0 %v429
        %536 = vmatpush1.msra.mxu0 %v428
        %537 = vmatprep.subr.mxu0 %v433
        %538 = vmatpush1.msra.mxu0 %v432
        %539 = vmatprep.subr.mxu0 0.0
        %540 = vmatpush1.msra.mxu0 0.0
        %541 = vmatprep.subr.mxu0 0.0
        %542 = vmatpush1.msra.mxu0 0.0
        %543 = vmatprep.subr.mxu0 0.0
        %544 = vmatpush1.msra.mxu0 0.0
        %545 = vmatprep.subr.mxu0 0.0
        %546 = vmatpush1.msra.mxu0 0.0
        %547 = vmatprep.subr.mxu0 0.0
        %548 = vmatpush1.msra.mxu0 0.0
        %549 = vmatprep.subr.mxu0 0.0
        %550 = vmatpush1.msra.mxu0 0.0
        %551 = vmatprep.subr.mxu0 0.0
        %552 = vmatpush1.msra.mxu0 0.0
        %553 = vmatprep.subr.mxu0 0.0
        %554 = vmatpush1.msra.mxu0 0.0
        %555 = vmatprep.subr.mxu0 0.0
        %556 = vmatpush1.msra.mxu0 0.0
        %557 = vmatprep.subr.mxu0 0.0
        %558 = vmatpush1.msra.mxu0 0.0
        %559 = vmatprep.subr.mxu0 0.0
        %560 = vmatpush1.msra.mxu0 0.0
        %561 = vmatprep.subr.mxu0 0.0
        %562 = vmatpush1.msra.mxu0 0.0
        %563 = vmatprep.subr.mxu0 0.0
        %564 = vmatpush1.msra.mxu0 0.0
        %565 = vmatprep.subr.mxu0 0.0
        %566 = vmatpush1.msra.mxu0 0.0
        %567 = vmatprep.subr.mxu0 0.0
        %568 = vmatpush1.msra.mxu0 0.0
        %569 = vmatprep.subr.mxu0 0.0
        %570 = vmatpush1.msra.mxu0 0.0
        %571 = vmatprep.subr.mxu0 0.0
        %572 = vmatpush1.msra.mxu0 0.0
        %573 = vmatprep.subr.mxu0 0.0
        %574 = vmatpush1.msra.mxu0 0.0
        %575 = vmatprep.subr.mxu0 0.0
        %576 = vmatpush1.msra.mxu0 0.0
        %577 = vmatprep.subr.mxu0 0.0
        %578 = vmatpush1.msra.mxu0 0.0
        %579 = vmatprep.subr.mxu0 0.0
        %580 = vmatpush1.msra.mxu0 0.0
        %581 = vmatprep.subr.mxu0 0.0
        %582 = vmatpush1.msra.mxu0 0.0
        %583 = vmatprep.subr.mxu0 0.0
        %584 = vmatpush1.msra.mxu0 0.0
        %585 = vmatprep.subr.mxu0 0.0
        %586 = vmatpush1.msra.mxu0 0.0
        %587 = vmatprep.subr.mxu0 0.0
        %588 = vmatpush1.msra.mxu0 0.0
        %589 = vmatprep.subr.mxu0 0.0
        %590 = vmatpush1.msra.mxu0 0.0
        %591 = vmatprep.subr.mxu0 0.0
        %592 = vmatpush1.msra.mxu0 0.0
        %593 = vmatprep.subr.mxu0 0.0
        %594 = vmatpush1.msra.mxu0 0.0
        %595 = vmatprep.mubr.f32.mxu0 0.0
        %596 = vmatmul.mubr.f32.gmra.mrb[0].mxu0 %v458
        %v597 = vpop.f32.mrb[0].mxu0
        %v598 = vadd.f32 %v447, %v597
        %v599 = vpop.f32.mrb[0].mxu0
        %v600 = vadd.f32 %v451, %v599
        %601 = vdwg.mxu0
        %v602 = vrot.slane %v527, 4
        %v603 = vadd.f32 %v527, %v602
        %v604 = vrot.slane %v603, 2
        %v605 = vadd.f32 %v603, %v604
        %v606 = vrot.slane %v605, 1
        %v607 = vadd.f32 %v605, %v606
        %v608 = vrot.slane %v529, 4
        %v609 = vadd.f32 %v529, %v608
        %v610 = vrot.slane %v609, 2
        %v611 = vadd.f32 %v609, %v610
        %v612 = vrot.slane %v611, 1
        %v613 = vadd.f32 %v611, %v612
        %v614 = vrot.slane %v598, 4
        %v615 = vadd.f32 %v598, %v614
        %v616 = vrot.slane %v615, 2
        %v617 = vadd.f32 %v615, %v616
        %v618 = vrot.slane %v617, 1
        %v619 = vadd.f32 %v617, %v618
        %v620 = vrot.slane %v600, 4
        %v621 = vadd.f32 %v600, %v620
        %v622 = vrot.slane %v621, 2
        %v623 = vadd.f32 %v621, %v622
        %v624 = vrot.slane %v623, 1
        %v625 = vadd.f32 %v623, %v624
        %v626 = vrcp.pop 8.0
        %v627 = vmul.f32 %v607, %v626
        %v628 = vmul.f32 %v613, %v626
        %v629 = vmul.f32 %v619, %v626
        %v630 = vmul.f32 %v625, %v626
        %v631 = vsub.f32 %v527, %v627
        %v632 = vsub.f32 %v529, %v628
        %v633 = vsub.f32 %v598, %v629
        %v634 = vsub.f32 %v600, %v630
        %v635 = vmul.f32 %v631, %v631
        %v636 = vmul.f32 %v632, %v632
        %v637 = vmul.f32 %v633, %v633
        %v638 = vmul.f32 %v634, %v634
        %v639 = vrot.slane %v635, 4
        %v640 = vadd.f32 %v635, %v639
        %v641 = vrot.slane %v640, 2
        %v642 = vadd.f32 %v640, %v641
        %v643 = vrot.slane %v642, 1
        %v644 = vadd.f32 %v642, %v643
        %v645 = vrot.slane %v636, 4
        %v646 = vadd.f32 %v636, %v645
        %v647 = vrot.slane %v646, 2
        %v648 = vadd.f32 %v646, %v647
        %v649 = vrot.slane %v648, 1
        %v650 = vadd.f32 %v648, %v649
        %v651 = vrot.slane %v637, 4
        %v652 = vadd.f32 %v637, %v651
        %v653 = vrot.slane %v652, 2
        %v654 = vadd.f32 %v652, %v653
        %v655 = vrot.slane %v654, 1
        %v656 = vadd.f32 %v654, %v655
        %v657 = vrot.slane %v638, 4
        %v658 = vadd.f32 %v638, %v657
        %v659 = vrot.slane %v658, 2
        %v660 = vadd.f32 %v658, %v659
        %v661 = vrot.slane %v660, 1
        %v662 = vadd.f32 %v660, %v661
        %v663 = vmul.f32 %v644, %v626
        %v664 = vmul.f32 %v650, %v626
        %v665 = vmul.f32 %v656, %v626
        %v666 = vmul.f32 %v662, %v626
        %v667 = vadd.f32 %v663, 1e-05
        %v668 = vadd.f32 %v664, 1e-05
        %v669 = vadd.f32 %v665, 1e-05
        %v670 = vadd.f32 %v666, 1e-05
        %v671 = vrsqrt.pop %v667
        %v672 = vrsqrt.pop %v668
        %v673 = vrsqrt.pop %v669
        %v674 = vrsqrt.pop %v670
        %v675 = vmul.f32 %v631, %v671
        %v676 = vmul.f32 %v632, %v672
        %v677 = vmul.f32 %v633, %v673
        %v678 = vmul.f32 %v634, %v674
        %v679 = vld [vmem:[%s357] sm:$0xf]
        %v681 = vlaneseq
        %v682 = vshrl.u32 %v681, 7
        %v683 = vsub.s32 0, %v682
        %v684 = vrot.slane %v679, %v683
        %v685 = vlaneseq
        %v686 = vshrl.u32 %v685, 7
        %v687 = vsub.s32 1, %v686
        %v688 = vrot.slane %v679, %v687
        %v689 = vlaneseq
        %v690 = vshrl.u32 %v689, 7
        %v691 = vsub.s32 2, %v690
        %v692 = vrot.slane %v679, %v691
        %v693 = vlaneseq
        %v694 = vshrl.u32 %v693, 7
        %v695 = vsub.s32 3, %v694
        %v696 = vrot.slane %v679, %v695
        %v701 = vmul.f32 %v675, %v684
        %v702 = vmul.f32 %v676, %v688
        %v703 = vmul.f32 %v677, %v692
        %v704 = vmul.f32 %v678, %v696
        %v705 = vld [vmem:[%s412] sm:$0xf]
        %v707 = vlaneseq
        %v708 = vshrl.u32 %v707, 7
        %v709 = vsub.s32 0, %v708
        %v710 = vrot.slane %v705, %v709
        %v711 = vlaneseq
        %v712 = vshrl.u32 %v711, 7
        %v713 = vsub.s32 1, %v712
        %v714 = vrot.slane %v705, %v713
        %v715 = vlaneseq
        %v716 = vshrl.u32 %v715, 7
        %v717 = vsub.s32 2, %v716
        %v718 = vrot.slane %v705, %v717
        %v719 = vlaneseq
        %v720 = vshrl.u32 %v719, 7
        %v721 = vsub.s32 3, %v720
        %v722 = vrot.slane %v705, %v721
        %v727 = vadd.f32 %v701, %v710
        %v728 = vadd.f32 %v702, %v714
        %v729 = vadd.f32 %v703, %v718
        %v730 = vadd.f32 %v704, %v722
        %v731 = vmul.f32 %v416, %v727
        %v732 = vmul.f32 %v417, %v728
        %v733 = vmul.f32 %v731, 0.01
        %v734 = vmul.f32 %v732, 0.01
        %v735 = vmax.f32 %v731, %v733
        %v736 = vmax.f32 %v732, %v734
        %v737 = vmul.f32 %v735, 0.7
        %v738 = vmul.f32 %v736, 0.7
        %v739 = vmul.f32 %v729, 0.3
        %v740 = vmul.f32 %v730, 0.3
        %v741 = vadd.f32 %v737, %v739
        %v742 = vadd.f32 %v738, %v740
        %v743 = vxor.u32 %v741, 2147483648
        %v744 = vxor.u32 %v742, 2147483648
        %v745 = vmul.f32 %v743, 1.442695
        %v746 = vpow.pop %v745
        %v747 = vmul.f32 %v744, 1.442695
        %v748 = vpow.pop %v747
        %v749 = vadd.f32 %v746, 1.0
        %v750 = vadd.f32 %v748, 1.0
        %v751 = vrcp.pop %v749
        %v752 = vmul.f32 1.0, %v751
        %v753 = vrcp.pop %v750
        %v754 = vmul.f32 1.0, %v753
        %v755 = vmul.f32 %v741, %v752
        %v756 = vmul.f32 %v742, %v754
        %757 = vst [vmem:[%s404] sm:$0xff] %v755
        %758 = vst [vmem:[%s404 + $0x8] sm:$0xff] %v756
        %s759 = sand.u32 %s186, 1
        %s760 = scalar_lea.sflag [#allocation4], %s759
        %s761 = sand.u32 %s186, 1
        %s762 = smul.addr %s761, 16
        %s763 = scalar_lea.vmem [#allocation11], %s762
        // Predicated region
        $region65: #{tpu_custom_call.1} parent=43 // pred_check
          %p764 = pneg %p196
        $region66: #{tpu_custom_call.1} parent=43 // pred_check_branch
          %766 = sbr.rel (%p764) target = $region68
        $region67: #{tpu_custom_call.1} parent=43 // pred_region
          %s767 = smul.u32 2, %s27
          %s769 = ssub.s32 256, 256
          %770 = vsyncadd %s760, %s769
          %s771 = smul.addr %s767, 128
          %s772 = scalar_lea.hbm %s6, %s771
          %s774 = sshll.u32 %s763, 4
          %s775 = int_to_ptr.vmem [resolvable:$true] %s774
          %777 = dma.vmem_to_hbm [thread:$0]  %s775, 256, %s772, %s760
        $region68: #{tpu_custom_call.1} parent=43 // pred_fallthru
          _
      $region44: #{tpu_custom_call.1} parent=5 // pred_fallthru
        _
      %p778 = scmp.le.s32.totalorder 2, %s22
      // Predicated region
      $region69: #{tpu_custom_call.1} parent=5 // pred_check
        %p779 = pneg %p778
      $region70: #{tpu_custom_call.1} parent=5 // pred_check_branch
        %781 = sbr.rel (%p779) target = $region72
      $region71: #{tpu_custom_call.1} parent=5 // pred_region
        %s782 = ssub.s32 %s22, 2
        // Predicated region
        $region73: #{tpu_custom_call.1} parent=71 // pred_check
          %p783 = pneg %p202
        $region74: #{tpu_custom_call.1} parent=71 // pred_check_branch
          %785 = sbr.rel (%p783) target = $region76
        $region75: #{tpu_custom_call.1} parent=71 // pred_region
          %s786 = sand.u32 %s187, 1
          %s787 = scalar_lea.sflag [#allocation4], %s786
          %s788 = sand.u32 %s187, 1
          %s789 = smul.addr %s788, 16
          %s790 = scalar_lea.vmem [#allocation11], %s789
          %791 = dma.done %s787, 256
        $region76: #{tpu_custom_call.1} parent=71 // pred_fallthru
          _
      $region72: #{tpu_custom_call.1} parent=5 // pred_fallthru
        _
    $region6: #{tpu_custom_call.1} parent=1 // loop_footer
      %s26 = sadd.s32 1, %s22
    $region7: #{tpu_custom_call.1} parent=1 // loop_footer_branch
      %21 = sbr.rel target = $region3
    $region8: #{tpu_custom_call.1} parent=1 // loop_exit
      _
    %792 = vsyncpa [#allocation3], 1
    %s793 = scalar_lea.sflag [#allocation3], 1
    %794 = vsyncpa %s793, 1
    %795 = vsyncpa [#allocation6], 1
    %s796 = scalar_lea.sflag [#allocation6], 1
    %797 = vsyncpa %s796, 1
    %798 = vsyncpa [#allocation9], 1
    %s799 = scalar_lea.sflag [#allocation9], 1
    %800 = vsyncpa %s799, 1
    %801 = vsyncpa [#allocation4], 1
    %s802 = scalar_lea.sflag [#allocation4], 1
    %803 = vsyncpa %s802, 1

</llo_original>
